<compile_context>
chip_gen: v7x
topology: tpu7x:2x2x1
jax: 0.10.0
libtpu: 0.0.40
codegen_flags: <defaults>
</compile_context>

<pallas_src>
import functools

import jax
import jax.numpy as jnp
from jax.experimental import pallas as pl
from jax.experimental.pallas import tpu as pltpu


def _gather_dma_kernel(idx_ref, x_hbm_ref, o_ref, sems, *, slices_per_step):
    """Copy `slices_per_step` selected temporal slices HBM -> output VMEM block.

    idx_ref:   (n_pad,) int32 in SMEM (scalar prefetch) — source temporal ids.
    x_hbm_ref: (C, T, rows, lanes) raw HBM ref (memory_space=pl.ANY).
    o_ref:     (C, K, rows, lanes) auto-pipelined output block for this step.
    sems:      K DMA semaphores so all K copies are in flight concurrently.
    """
    i = pl.program_id(0)
    base = i * slices_per_step

    copies = []
    for j in range(slices_per_step):  # static unroll; K is small
        t = idx_ref[base + j]  # SMEM scalar read
        cp = pltpu.make_async_copy(
            x_hbm_ref.at[:, pl.ds(t, 1), :, :],  # (C, 1, rows, lanes) HBM window
            o_ref.at[:, pl.ds(j, 1), :, :],      # matching slot in output tile
            sems.at[j],
        )
        cp.start()
        copies.append(cp)
    # All K DMAs were issued back-to-back (DMA engine saturated); now drain.
    for cp in copies:
        cp.wait()


def temporal_index_select_pallas(x, indices, *, min_out_bytes_for_pallas=512 * 1024):
    """index_select(x, dim=-3, index=indices) for x of shape (C, T, H, W)."""
    C, T, H, W = x.shape
    n = int(indices.shape[0])
    indices = indices.astype(jnp.int32)

    itemsize = jnp.dtype(x.dtype).itemsize
    slice_bytes = C * H * W * itemsize

    # Tiny problem: fixed pallas_call launch + DMA setup exceeds the copy time;
    # XLA's gather is strictly faster there.
    if n * slice_bytes < min_out_bytes_for_pallas:
        return jnp.take(x, indices, axis=-3)

    # Lane-dense view of the trailing spatial dims (free, contiguous reshape).
    HW = H * W
    if HW % 128 == 0:
        rows, lanes = HW // 128, 128
    else:
        # TODO(synk): pad W to a multiple of 128 for full lane density.
        rows, lanes = H, W
    xr = x.reshape(C, T, rows, lanes)

    # Slices copied per grid step: amortize per-step overhead while keeping the
    # double-buffered output block (2 * K * slice_bytes) small enough for the
    # default scoped-VMEM limit on all chips (v5e/v6e/v7x).
    vmem_budget_per_buffer = 4 << 20
    K = max(1, min(8, vmem_budget_per_buffer // max(slice_bytes, 1), n))
    n_pad = pl.cdiv(n, K) * K
    idx_pad = jnp.pad(indices, (0, n_pad - n), mode="edge")

    out = pl.pallas_call(
        functools.partial(_gather_dma_kernel, slices_per_step=K),
        out_shape=jax.ShapeDtypeStruct((C, n_pad, rows, lanes), x.dtype),
        grid_spec=pltpu.PrefetchScalarGridSpec(
            num_scalar_prefetch=1,
            grid=(n_pad // K,),
            in_specs=[
                # Raw HBM ref; we gather slices from it with manual DMAs.
                pl.BlockSpec(memory_space=pl.ANY),
            ],
            out_specs=pl.BlockSpec(
                (C, K, rows, lanes), lambda i, idx_ref: (0, i, 0, 0)
            ),
            scratch_shapes=[pltpu.SemaphoreType.DMA((K,))],
        ),
        compiler_params=pltpu.CompilerParams(
            # Grid steps write disjoint output blocks -> shard across TCs (v7x).
            dimension_semantics=("parallel",),
        ),
        cost_estimate=pl.CostEstimate(
            flops=0,
            transcendentals=0,
            bytes_accessed=(n + n_pad) * slice_bytes,
        ),
    )(idx_pad, xr)

    # Drop any padded temporal slots and restore the original spatial shape.
    return out[:, :n].reshape(C, n, H, W)


def random_uniform_temporal_subsample(x, num_samples, key, *, min_out_bytes_for_pallas=512 * 1024):
    """Pallas equivalent of RandomUniformTemporalSubsample.forward.

    x: (C, T, H, W).  Returns (subsampled (C, num_samples, H, W), indices).
    """
    T = x.shape[-3]
    if T < num_samples:
        # UniformTemporalSubsample path: linspace indices (truncation == .long()).
        idx = jnp.linspace(0.0, T - 1, num_samples).astype(jnp.int32)
    else:
        # randperm(T)[:num_samples].sort()
        perm = jax.random.permutation(key, T)[:num_samples]
        idx = jnp.sort(perm).astype(jnp.int32)
    out = temporal_index_select_pallas(
        x, idx, min_out_bytes_for_pallas=min_out_bytes_for_pallas
    )
    return out, idx


if __name__ == "__main__":
    key = jax.random.PRNGKey(0)
    k_data, k_perm = jax.random.split(key)

    # Small shapes consistent with the forward: (C, T, H, W), subsample T.
    # H*W = 128 so the lane-dense reshape path is exercised.
    C, T, H, W = 4, 16, 8, 16
    num_samples = 6

    x = jax.random.normal(k_data, (C, T, H, W), dtype=jnp.float32)

    # min_out_bytes_for_pallas=0 forces the Pallas path even at demo sizes.
    out, idx = random_uniform_temporal_subsample(
        x, num_samples, k_perm, min_out_bytes_for_pallas=0
    )
    out = jax.block_until_ready(out)

    # Reference check against plain JAX gather.
    ref = jnp.take(x, idx, axis=-3)
    assert out.shape == (C, num_samples, H, W)
    assert jnp.array_equal(out, ref), "Pallas gather mismatch vs reference"

    # Also exercise the T < num_samples (uniform linspace) branch, with
    # repeated indices and a padded (n % K != 0 is impossible here, but the
    # edge-padding path is still covered when K < n).
    x_small = x[:, :4]  # T=4 < num_samples=6
    out2, idx2 = random_uniform_temporal_subsample(
        x_small, num_samples, k_perm, min_out_bytes_for_pallas=0
    )
    out2 = jax.block_until_ready(out2)
    ref2 = jnp.take(x_small, idx2, axis=-3)
    assert out2.shape == (C, num_samples, H, W)
    assert jnp.array_equal(out2, ref2), "Pallas gather mismatch (linspace branch)"

    print("KERNEL_OK")
</pallas_src>

<mosaic_0001>
module attributes {stable_mosaic.version = 11 : i64} {
  func.func @_gather_dma_kernel(%arg0: i32, %arg1: memref<6xi32, #tpu.memory_space<smem>>, %arg2: memref<4x16x1x128xf32, #tpu.memory_space<any>>, %arg3: memref<4x6x1x128xf32, #tpu.memory_space<vmem>>, %arg4: memref<6x!tpu.dma_semaphore, #tpu.memory_space<semaphore_mem>>) attributes {dimension_semantics = [#tpu.dimension_semantics<parallel>], iteration_bounds = array<i64: 1>, scalar_prefetch = 1 : i64, scratch_operands = 1 : i64, tpu.core_type = #tpu.core_type<tc>, window_params = [{}, {transform_indices = @transform_1, window_bounds = array<i64: 4, 6, 1, 128>}]} {
    %c6_i32 = arith.constant 6 : i32
    %0 = arith.muli %arg0, %c6_i32 : i32
    %c0_i32 = arith.constant 0 : i32
    %1 = arith.addi %0, %c0_i32 : i32
    %2 = arith.index_cast %1 : i32 to index
    %3 = memref.load %arg1[%2] : memref<6xi32, #tpu.memory_space<smem>>
    %c0_i32_0 = arith.constant 0 : i32
    %c0_i32_1 = arith.constant 0 : i32
    %c0_i32_2 = arith.constant 0 : i32
    %c0_i32_3 = arith.constant 0 : i32
    %4 = tpu.memref_slice %arg2[%c0_i32_1, %3, %c0_i32_2, %c0_i32_3] : memref<4x16x1x128xf32, #tpu.memory_space<any>> -> memref<4x1x1x128xf32, #tpu.memory_space<any>>
    %c0_i32_4 = arith.constant 0 : i32
    %c0_i32_5 = arith.constant 0 : i32
    %c0_i32_6 = arith.constant 0 : i32
    %c0_i32_7 = arith.constant 0 : i32
    %5 = tpu.memref_slice %arg3[%c0_i32_4, %c0_i32_5, %c0_i32_6, %c0_i32_7] : memref<4x6x1x128xf32, #tpu.memory_space<vmem>> -> memref<4x1x1x128xf32, #tpu.memory_space<vmem>>
    %6 = tpu.memref_slice %arg4[%c0_i32_0] : memref<6x!tpu.dma_semaphore, #tpu.memory_space<semaphore_mem>> -> memref<1x!tpu.dma_semaphore, #tpu.memory_space<semaphore_mem>>
    %7 = tpu.memref_squeeze %6 : memref<1x!tpu.dma_semaphore, #tpu.memory_space<semaphore_mem>> -> memref<!tpu.dma_semaphore, #tpu.memory_space<semaphore_mem>>
    tpu.enqueue_dma source(%4 : memref<4x1x1x128xf32, #tpu.memory_space<any>>) target(%5 : memref<4x1x1x128xf32, #tpu.memory_space<vmem>>) target_semaphore(%7 : memref<!tpu.dma_semaphore, #tpu.memory_space<semaphore_mem>>)
    %c1_i32 = arith.constant 1 : i32
    %8 = arith.addi %0, %c1_i32 : i32
    %9 = arith.index_cast %8 : i32 to index
    %10 = memref.load %arg1[%9] : memref<6xi32, #tpu.memory_space<smem>>
    %c1_i32_8 = arith.constant 1 : i32
    %c0_i32_9 = arith.constant 0 : i32
    %c0_i32_10 = arith.constant 0 : i32
    %c0_i32_11 = arith.constant 0 : i32
    %11 = tpu.memref_slice %arg2[%c0_i32_9, %10, %c0_i32_10, %c0_i32_11] : memref<4x16x1x128xf32, #tpu.memory_space<any>> -> memref<4x1x1x128xf32, #tpu.memory_space<any>>
    %c0_i32_12 = arith.constant 0 : i32
    %c1_i32_13 = arith.constant 1 : i32
    %c0_i32_14 = arith.constant 0 : i32
    %c0_i32_15 = arith.constant 0 : i32
    %12 = tpu.memref_slice %arg3[%c0_i32_12, %c1_i32_13, %c0_i32_14, %c0_i32_15] : memref<4x6x1x128xf32, #tpu.memory_space<vmem>> -> memref<4x1x1x128xf32, #tpu.memory_space<vmem>>
    %13 = tpu.memref_slice %arg4[%c1_i32_8] : memref<6x!tpu.dma_semaphore, #tpu.memory_space<semaphore_mem>> -> memref<1x!tpu.dma_semaphore, #tpu.memory_space<semaphore_mem>>
    %14 = tpu.memref_squeeze %13 : memref<1x!tpu.dma_semaphore, #tpu.memory_space<semaphore_mem>> -> memref<!tpu.dma_semaphore, #tpu.memory_space<semaphore_mem>>
    tpu.enqueue_dma source(%11 : memref<4x1x1x128xf32, #tpu.memory_space<any>>) target(%12 : memref<4x1x1x128xf32, #tpu.memory_space<vmem>>) target_semaphore(%14 : memref<!tpu.dma_semaphore, #tpu.memory_space<semaphore_mem>>)
    %c2_i32 = arith.constant 2 : i32
    %15 = arith.addi %0, %c2_i32 : i32
    %16 = arith.index_cast %15 : i32 to index
    %17 = memref.load %arg1[%16] : memref<6xi32, #tpu.memory_space<smem>>
    %c2_i32_16 = arith.constant 2 : i32
    %c0_i32_17 = arith.constant 0 : i32
    %c0_i32_18 = arith.constant 0 : i32
    %c0_i32_19 = arith.constant 0 : i32
    %18 = tpu.memref_slice %arg2[%c0_i32_17, %17, %c0_i32_18, %c0_i32_19] : memref<4x16x1x128xf32, #tpu.memory_space<any>> -> memref<4x1x1x128xf32, #tpu.memory_space<any>>
    %c0_i32_20 = arith.constant 0 : i32
    %c2_i32_21 = arith.constant 2 : i32
    %c0_i32_22 = arith.constant 0 : i32
    %c0_i32_23 = arith.constant 0 : i32
    %19 = tpu.memref_slice %arg3[%c0_i32_20, %c2_i32_21, %c0_i32_22, %c0_i32_23] : memref<4x6x1x128xf32, #tpu.memory_space<vmem>> -> memref<4x1x1x128xf32, #tpu.memory_space<vmem>>
    %20 = tpu.memref_slice %arg4[%c2_i32_16] : memref<6x!tpu.dma_semaphore, #tpu.memory_space<semaphore_mem>> -> memref<1x!tpu.dma_semaphore, #tpu.memory_space<semaphore_mem>>
    %21 = tpu.memref_squeeze %20 : memref<1x!tpu.dma_semaphore, #tpu.memory_space<semaphore_mem>> -> memref<!tpu.dma_semaphore, #tpu.memory_space<semaphore_mem>>
    tpu.enqueue_dma source(%18 : memref<4x1x1x128xf32, #tpu.memory_space<any>>) target(%19 : memref<4x1x1x128xf32, #tpu.memory_space<vmem>>) target_semaphore(%21 : memref<!tpu.dma_semaphore, #tpu.memory_space<semaphore_mem>>)
    %c3_i32 = arith.constant 3 : i32
    %22 = arith.addi %0, %c3_i32 : i32
    %23 = arith.index_cast %22 : i32 to index
    %24 = memref.load %arg1[%23] : memref<6xi32, #tpu.memory_space<smem>>
    %c3_i32_24 = arith.constant 3 : i32
    %c0_i32_25 = arith.constant 0 : i32
    %c0_i32_26 = arith.constant 0 : i32
    %c0_i32_27 = arith.constant 0 : i32
    %25 = tpu.memref_slice %arg2[%c0_i32_25, %24, %c0_i32_26, %c0_i32_27] : memref<4x16x1x128xf32, #tpu.memory_space<any>> -> memref<4x1x1x128xf32, #tpu.memory_space<any>>
    %c0_i32_28 = arith.constant 0 : i32
    %c3_i32_29 = arith.constant 3 : i32
    %c0_i32_30 = arith.constant 0 : i32
    %c0_i32_31 = arith.constant 0 : i32
    %26 = tpu.memref_slice %arg3[%c0_i32_28, %c3_i32_29, %c0_i32_30, %c0_i32_31] : memref<4x6x1x128xf32, #tpu.memory_space<vmem>> -> memref<4x1x1x128xf32, #tpu.memory_space<vmem>>
    %27 = tpu.memref_slice %arg4[%c3_i32_24] : memref<6x!tpu.dma_semaphore, #tpu.memory_space<semaphore_mem>> -> memref<1x!tpu.dma_semaphore, #tpu.memory_space<semaphore_mem>>
    %28 = tpu.memref_squeeze %27 : memref<1x!tpu.dma_semaphore, #tpu.memory_space<semaphore_mem>> -> memref<!tpu.dma_semaphore, #tpu.memory_space<semaphore_mem>>
    tpu.enqueue_dma source(%25 : memref<4x1x1x128xf32, #tpu.memory_space<any>>) target(%26 : memref<4x1x1x128xf32, #tpu.memory_space<vmem>>) target_semaphore(%28 : memref<!tpu.dma_semaphore, #tpu.memory_space<semaphore_mem>>)
    %c4_i32 = arith.constant 4 : i32
    %29 = arith.addi %0, %c4_i32 : i32
    %30 = arith.index_cast %29 : i32 to index
    %31 = memref.load %arg1[%30] : memref<6xi32, #tpu.memory_space<smem>>
    %c4_i32_32 = arith.constant 4 : i32
    %c0_i32_33 = arith.constant 0 : i32
    %c0_i32_34 = arith.constant 0 : i32
    %c0_i32_35 = arith.constant 0 : i32
    %32 = tpu.memref_slice %arg2[%c0_i32_33, %31, %c0_i32_34, %c0_i32_35] : memref<4x16x1x128xf32, #tpu.memory_space<any>> -> memref<4x1x1x128xf32, #tpu.memory_space<any>>
    %c0_i32_36 = arith.constant 0 : i32
    %c4_i32_37 = arith.constant 4 : i32
    %c0_i32_38 = arith.constant 0 : i32
    %c0_i32_39 = arith.constant 0 : i32
    %33 = tpu.memref_slice %arg3[%c0_i32_36, %c4_i32_37, %c0_i32_38, %c0_i32_39] : memref<4x6x1x128xf32, #tpu.memory_space<vmem>> -> memref<4x1x1x128xf32, #tpu.memory_space<vmem>>
    %34 = tpu.memref_slice %arg4[%c4_i32_32] : memref<6x!tpu.dma_semaphore, #tpu.memory_space<semaphore_mem>> -> memref<1x!tpu.dma_semaphore, #tpu.memory_space<semaphore_mem>>
    %35 = tpu.memref_squeeze %34 : memref<1x!tpu.dma_semaphore, #tpu.memory_space<semaphore_mem>> -> memref<!tpu.dma_semaphore, #tpu.memory_space<semaphore_mem>>
    tpu.enqueue_dma source(%32 : memref<4x1x1x128xf32, #tpu.memory_space<any>>) target(%33 : memref<4x1x1x128xf32, #tpu.memory_space<vmem>>) target_semaphore(%35 : memref<!tpu.dma_semaphore, #tpu.memory_space<semaphore_mem>>)
    %c5_i32 = arith.constant 5 : i32
    %36 = arith.addi %0, %c5_i32 : i32
    %37 = arith.index_cast %36 : i32 to index
    %38 = memref.load %arg1[%37] : memref<6xi32, #tpu.memory_space<smem>>
    %c5_i32_40 = arith.constant 5 : i32
    %c0_i32_41 = arith.constant 0 : i32
    %c0_i32_42 = arith.constant 0 : i32
    %c0_i32_43 = arith.constant 0 : i32
    %39 = tpu.memref_slice %arg2[%c0_i32_41, %38, %c0_i32_42, %c0_i32_43] : memref<4x16x1x128xf32, #tpu.memory_space<any>> -> memref<4x1x1x128xf32, #tpu.memory_space<any>>
    %c0_i32_44 = arith.constant 0 : i32
    %c5_i32_45 = arith.constant 5 : i32
    %c0_i32_46 = arith.constant 0 : i32
    %c0_i32_47 = arith.constant 0 : i32
    %40 = tpu.memref_slice %arg3[%c0_i32_44, %c5_i32_45, %c0_i32_46, %c0_i32_47] : memref<4x6x1x128xf32, #tpu.memory_space<vmem>> -> memref<4x1x1x128xf32, #tpu.memory_space<vmem>>
    %41 = tpu.memref_slice %arg4[%c5_i32_40] : memref<6x!tpu.dma_semaphore, #tpu.memory_space<semaphore_mem>> -> memref<1x!tpu.dma_semaphore, #tpu.memory_space<semaphore_mem>>
    %42 = tpu.memref_squeeze %41 : memref<1x!tpu.dma_semaphore, #tpu.memory_space<semaphore_mem>> -> memref<!tpu.dma_semaphore, #tpu.memory_space<semaphore_mem>>
    tpu.enqueue_dma source(%39 : memref<4x1x1x128xf32, #tpu.memory_space<any>>) target(%40 : memref<4x1x1x128xf32, #tpu.memory_space<vmem>>) target_semaphore(%42 : memref<!tpu.dma_semaphore, #tpu.memory_space<semaphore_mem>>)
    %c0_i32_48 = arith.constant 0 : i32
    %c0_i32_49 = arith.constant 0 : i32
    %c0_i32_50 = arith.constant 0 : i32
    %c0_i32_51 = arith.constant 0 : i32
    %43 = tpu.memref_slice %arg2[%c0_i32_49, %3, %c0_i32_50, %c0_i32_51] : memref<4x16x1x128xf32, #tpu.memory_space<any>> -> memref<4x1x1x128xf32, #tpu.memory_space<any>>
    %c0_i32_52 = arith.constant 0 : i32
    %c0_i32_53 = arith.constant 0 : i32
    %c0_i32_54 = arith.constant 0 : i32
    %c0_i32_55 = arith.constant 0 : i32
    %44 = tpu.memref_slice %arg3[%c0_i32_52, %c0_i32_53, %c0_i32_54, %c0_i32_55] : memref<4x6x1x128xf32, #tpu.memory_space<vmem>> -> memref<4x1x1x128xf32, #tpu.memory_space<vmem>>
    %45 = tpu.memref_slice %arg4[%c0_i32_48] : memref<6x!tpu.dma_semaphore, #tpu.memory_space<semaphore_mem>> -> memref<1x!tpu.dma_semaphore, #tpu.memory_space<semaphore_mem>>
    %46 = tpu.memref_squeeze %45 : memref<1x!tpu.dma_semaphore, #tpu.memory_space<semaphore_mem>> -> memref<!tpu.dma_semaphore, #tpu.memory_space<semaphore_mem>>
    tpu.wait_dma2 semaphore(%46 : memref<!tpu.dma_semaphore, #tpu.memory_space<semaphore_mem>>) src(%43 : memref<4x1x1x128xf32, #tpu.memory_space<any>>) dst(%44 : memref<4x1x1x128xf32, #tpu.memory_space<vmem>>)
    %c1_i32_56 = arith.constant 1 : i32
    %c0_i32_57 = arith.constant 0 : i32
    %c0_i32_58 = arith.constant 0 : i32
    %c0_i32_59 = arith.constant 0 : i32
    %47 = tpu.memref_slice %arg2[%c0_i32_57, %10, %c0_i32_58, %c0_i32_59] : memref<4x16x1x128xf32, #tpu.memory_space<any>> -> memref<4x1x1x128xf32, #tpu.memory_space<any>>
    %c0_i32_60 = arith.constant 0 : i32
    %c1_i32_61 = arith.constant 1 : i32
    %c0_i32_62 = arith.constant 0 : i32
    %c0_i32_63 = arith.constant 0 : i32
    %48 = tpu.memref_slice %arg3[%c0_i32_60, %c1_i32_61, %c0_i32_62, %c0_i32_63] : memref<4x6x1x128xf32, #tpu.memory_space<vmem>> -> memref<4x1x1x128xf32, #tpu.memory_space<vmem>>
    %49 = tpu.memref_slice %arg4[%c1_i32_56] : memref<6x!tpu.dma_semaphore, #tpu.memory_space<semaphore_mem>> -> memref<1x!tpu.dma_semaphore, #tpu.memory_space<semaphore_mem>>
    %50 = tpu.memref_squeeze %49 : memref<1x!tpu.dma_semaphore, #tpu.memory_space<semaphore_mem>> -> memref<!tpu.dma_semaphore, #tpu.memory_space<semaphore_mem>>
    tpu.wait_dma2 semaphore(%50 : memref<!tpu.dma_semaphore, #tpu.memory_space<semaphore_mem>>) src(%47 : memref<4x1x1x128xf32, #tpu.memory_space<any>>) dst(%48 : memref<4x1x1x128xf32, #tpu.memory_space<vmem>>)
    %c2_i32_64 = arith.constant 2 : i32
    %c0_i32_65 = arith.constant 0 : i32
    %c0_i32_66 = arith.constant 0 : i32
    %c0_i32_67 = arith.constant 0 : i32
    %51 = tpu.memref_slice %arg2[%c0_i32_65, %17, %c0_i32_66, %c0_i32_67] : memref<4x16x1x128xf32, #tpu.memory_space<any>> -> memref<4x1x1x128xf32, #tpu.memory_space<any>>
    %c0_i32_68 = arith.constant 0 : i32
    %c2_i32_69 = arith.constant 2 : i32
    %c0_i32_70 = arith.constant 0 : i32
    %c0_i32_71 = arith.constant 0 : i32
    %52 = tpu.memref_slice %arg3[%c0_i32_68, %c2_i32_69, %c0_i32_70, %c0_i32_71] : memref<4x6x1x128xf32, #tpu.memory_space<vmem>> -> memref<4x1x1x128xf32, #tpu.memory_space<vmem>>
    %53 = tpu.memref_slice %arg4[%c2_i32_64] : memref<6x!tpu.dma_semaphore, #tpu.memory_space<semaphore_mem>> -> memref<1x!tpu.dma_semaphore, #tpu.memory_space<semaphore_mem>>
    %54 = tpu.memref_squeeze %53 : memref<1x!tpu.dma_semaphore, #tpu.memory_space<semaphore_mem>> -> memref<!tpu.dma_semaphore, #tpu.memory_space<semaphore_mem>>
    tpu.wait_dma2 semaphore(%54 : memref<!tpu.dma_semaphore, #tpu.memory_space<semaphore_mem>>) src(%51 : memref<4x1x1x128xf32, #tpu.memory_space<any>>) dst(%52 : memref<4x1x1x128xf32, #tpu.memory_space<vmem>>)
    %c3_i32_72 = arith.constant 3 : i32
    %c0_i32_73 = arith.constant 0 : i32
    %c0_i32_74 = arith.constant 0 : i32
    %c0_i32_75 = arith.constant 0 : i32
    %55 = tpu.memref_slice %arg2[%c0_i32_73, %24, %c0_i32_74, %c0_i32_75] : memref<4x16x1x128xf32, #tpu.memory_space<any>> -> memref<4x1x1x128xf32, #tpu.memory_space<any>>
    %c0_i32_76 = arith.constant 0 : i32
    %c3_i32_77 = arith.constant 3 : i32
    %c0_i32_78 = arith.constant 0 : i32
    %c0_i32_79 = arith.constant 0 : i32
    %56 = tpu.memref_slice %arg3[%c0_i32_76, %c3_i32_77, %c0_i32_78, %c0_i32_79] : memref<4x6x1x128xf32, #tpu.memory_space<vmem>> -> memref<4x1x1x128xf32, #tpu.memory_space<vmem>>
    %57 = tpu.memref_slice %arg4[%c3_i32_72] : memref<6x!tpu.dma_semaphore, #tpu.memory_space<semaphore_mem>> -> memref<1x!tpu.dma_semaphore, #tpu.memory_space<semaphore_mem>>
    %58 = tpu.memref_squeeze %57 : memref<1x!tpu.dma_semaphore, #tpu.memory_space<semaphore_mem>> -> memref<!tpu.dma_semaphore, #tpu.memory_space<semaphore_mem>>
    tpu.wait_dma2 semaphore(%58 : memref<!tpu.dma_semaphore, #tpu.memory_space<semaphore_mem>>) src(%55 : memref<4x1x1x128xf32, #tpu.memory_space<any>>) dst(%56 : memref<4x1x1x128xf32, #tpu.memory_space<vmem>>)
    %c4_i32_80 = arith.constant 4 : i32
    %c0_i32_81 = arith.constant 0 : i32
    %c0_i32_82 = arith.constant 0 : i32
    %c0_i32_83 = arith.constant 0 : i32
    %59 = tpu.memref_slice %arg2[%c0_i32_81, %31, %c0_i32_82, %c0_i32_83] : memref<4x16x1x128xf32, #tpu.memory_space<any>> -> memref<4x1x1x128xf32, #tpu.memory_space<any>>
    %c0_i32_84 = arith.constant 0 : i32
    %c4_i32_85 = arith.constant 4 : i32
    %c0_i32_86 = arith.constant 0 : i32
    %c0_i32_87 = arith.constant 0 : i32
    %60 = tpu.memref_slice %arg3[%c0_i32_84, %c4_i32_85, %c0_i32_86, %c0_i32_87] : memref<4x6x1x128xf32, #tpu.memory_space<vmem>> -> memref<4x1x1x128xf32, #tpu.memory_space<vmem>>
    %61 = tpu.memref_slice %arg4[%c4_i32_80] : memref<6x!tpu.dma_semaphore, #tpu.memory_space<semaphore_mem>> -> memref<1x!tpu.dma_semaphore, #tpu.memory_space<semaphore_mem>>
    %62 = tpu.memref_squeeze %61 : memref<1x!tpu.dma_semaphore, #tpu.memory_space<semaphore_mem>> -> memref<!tpu.dma_semaphore, #tpu.memory_space<semaphore_mem>>
    tpu.wait_dma2 semaphore(%62 : memref<!tpu.dma_semaphore, #tpu.memory_space<semaphore_mem>>) src(%59 : memref<4x1x1x128xf32, #tpu.memory_space<any>>) dst(%60 : memref<4x1x1x128xf32, #tpu.memory_space<vmem>>)
    %c5_i32_88 = arith.constant 5 : i32
    %c0_i32_89 = arith.constant 0 : i32
    %c0_i32_90 = arith.constant 0 : i32
    %c0_i32_91 = arith.constant 0 : i32
    %63 = tpu.memref_slice %arg2[%c0_i32_89, %38, %c0_i32_90, %c0_i32_91] : memref<4x16x1x128xf32, #tpu.memory_space<any>> -> memref<4x1x1x128xf32, #tpu.memory_space<any>>
    %c0_i32_92 = arith.constant 0 : i32
    %c5_i32_93 = arith.constant 5 : i32
    %c0_i32_94 = arith.constant 0 : i32
    %c0_i32_95 = arith.constant 0 : i32
    %64 = tpu.memref_slice %arg3[%c0_i32_92, %c5_i32_93, %c0_i32_94, %c0_i32_95] : memref<4x6x1x128xf32, #tpu.memory_space<vmem>> -> memref<4x1x1x128xf32, #tpu.memory_space<vmem>>
    %65 = tpu.memref_slice %arg4[%c5_i32_88] : memref<6x!tpu.dma_semaphore, #tpu.memory_space<semaphore_mem>> -> memref<1x!tpu.dma_semaphore, #tpu.memory_space<semaphore_mem>>
    %66 = tpu.memref_squeeze %65 : memref<1x!tpu.dma_semaphore, #tpu.memory_space<semaphore_mem>> -> memref<!tpu.dma_semaphore, #tpu.memory_space<semaphore_mem>>
    tpu.wait_dma2 semaphore(%66 : memref<!tpu.dma_semaphore, #tpu.memory_space<semaphore_mem>>) src(%63 : memref<4x1x1x128xf32, #tpu.memory_space<any>>) dst(%64 : memref<4x1x1x128xf32, #tpu.memory_space<vmem>>)
    return
  }
  func.func @transform_1(%arg0: i32, %arg1: memref<6xi32, #tpu.memory_space<smem>>) -> (i32, i32, i32, i32) {
    %c0_i32 = arith.constant 0 : i32
    %c0_i32_0 = arith.constant 0 : i32
    %c0_i32_1 = arith.constant 0 : i32
    %c0_i32_2 = arith.constant 0 : i32
    return %c0_i32, %arg0, %c0_i32_0, %c0_i32_1 : i32, i32, i32, i32
  }
}

</mosaic_0001>

<llo_original>
// kernel: tpu_custom_call.1
$region0: #{tpu_custom_call.1}
  #allocation0 [shape = 'u32[]', space=smem, size = 0x4, offset = 0x4, fixed_abs, tag = 'smem constant byte address 0x4 - core index']
  #allocation1 [shape = 'u32[144,128]{1,0:T(1,128)}', space=vmem, size = 0x12000, scoped, tag = 'internal scratch']
  #allocation2 [shape = 's32[6]{0}', space=sflag, size = 0x18, scoped, tag = 'scratch operand']
  #allocation3 [shape = 's32[1]{0}', space=sflag, size = 0x4, scoped, tag = 'scoped memory for tpu_custom_call.1']
  #allocation4 [shape = 'u8[512]{0}', space=smem, size = 0x200, scoped, tag = 'prefetched SMEM operand 0']
  #allocation7 [shape = 's32[]', space=sflag, size = 0x4, offset = 0, fixed_abs, tag = 'sflag constant byte address 0x0 - dummy sync flag']
  #allocation8 [shape = 's32[]', space=sflag, size = 0x4, offset = 0, fixed_abs, tag = 'sflag constant byte address 0x0 - dummy sync flag']
  #allocation9 [shape = 's32[]', space=sflag, size = 0x4, offset = 0, fixed_abs, tag = 'sflag constant byte address 0x0 - dummy sync flag']
  #allocation10 [shape = 's32[]', space=sflag, size = 0x4, offset = 0, fixed_abs, tag = 'sflag constant byte address 0x0 - dummy sync flag']
  #allocation11 [shape = 's32[]', space=sflag, size = 0x4, offset = 0, fixed_abs, tag = 'sflag constant byte address 0x0 - dummy sync flag']
  #allocation12 [shape = 's32[]', space=sflag, size = 0x4, offset = 0, fixed_abs, tag = 'sflag constant byte address 0x0 - dummy sync flag']
  %s0 = inlined_call_operand.hbm [shape: s32[6], index: 0, kind: input, shape index: {}]
  %s1 = inlined_call_operand.hbm [shape: f32[4,16,1,128], index: 1, kind: input, shape index: {}]
  %s2 = inlined_call_operand.hbm [shape: f32[4,6,1,128], index: 2, kind: output, shape index: {}]
  %s3 = sld [smem:[#allocation0]]
  $region10: #{tpu_custom_call.1} parent=0
    _
  %s5 = ssub.s32 1, %s3
  %s6 = scalar_select 0, %s5, %s3
  %8 = dma.hbm_to_smem %s0, 16, [#allocation4], [#allocation3]
  %9 = dma.done [#allocation3], 16
  %10 = sfence
  $region1: #{tpu_custom_call.1} parent=0
    #allocation5 [shape = 'u8[12288]{0}', space=vmem, size = 0x3000, scoped, tag = 'output window, operand 0, single buffered']
    #allocation6 [shape = 's32[1]{0}', space=sflag, size = 0x4, scoped, tag = 'scoped memory for tpu_custom_call.1']
    %11 = vsyncpa [#allocation6], 0
    %s12 = smul.u32 0, 6
    %s13 = sld [smem:[#allocation4 + %s12]]
    %s14 = smul.addr %s13, 16
    %s15 = scalar_lea.hbm %s1, %s14
    %s17 = sshll.u32 [#allocation5], 4
    %s18 = int_to_ptr.vmem [resolvable:$true] %s17
    %20 = dma.hbm_to_vmem [thread:$0]  %s15, 64, %s18, [#allocation2], 256, 96, 1
    %s21 = sadd.s32 %s12, 1
    %s22 = sld [smem:[#allocation4 + %s21]]
    %s23 = smul.addr %s22, 16
    %s24 = scalar_lea.hbm %s1, %s23
    %s25 = scalar_lea.vmem [#allocation5], 1
    %s26 = scalar_lea.sflag [#allocation2], 1
    %s28 = sshll.u32 %s25, 4
    %s29 = int_to_ptr.vmem [resolvable:$true] %s28
    %31 = dma.hbm_to_vmem [thread:$0]  %s24, 64, %s29, %s26, 256, 96, 1
    %s32 = sadd.s32 %s12, 2
    %s33 = sld [smem:[#allocation4 + %s32]]
    %s34 = smul.addr %s33, 16
    %s35 = scalar_lea.hbm %s1, %s34
    %s36 = scalar_lea.vmem [#allocation5], 2
    %s37 = scalar_lea.sflag [#allocation2], 2
    %s39 = sshll.u32 %s36, 4
    %s40 = int_to_ptr.vmem [resolvable:$true] %s39
    %42 = dma.hbm_to_vmem [thread:$0]  %s35, 64, %s40, %s37, 256, 96, 1
    %s43 = sadd.s32 %s12, 3
    %s44 = sld [smem:[#allocation4 + %s43]]
    %s45 = smul.addr %s44, 16
    %s46 = scalar_lea.hbm %s1, %s45
    %s47 = scalar_lea.vmem [#allocation5], 3
    %s48 = scalar_lea.sflag [#allocation2], 3
    %s50 = sshll.u32 %s47, 4
    %s51 = int_to_ptr.vmem [resolvable:$true] %s50
    %53 = dma.hbm_to_vmem [thread:$0]  %s46, 64, %s51, %s48, 256, 96, 1
    %s54 = sadd.s32 %s12, 4
    %s55 = sld [smem:[#allocation4 + %s54]]
    %s56 = smul.addr %s55, 16
    %s57 = scalar_lea.hbm %s1, %s56
    %s58 = scalar_lea.vmem [#allocation5], 4
    %s59 = scalar_lea.sflag [#allocation2], 4
    %s61 = sshll.u32 %s58, 4
    %s62 = int_to_ptr.vmem [resolvable:$true] %s61
    %64 = dma.hbm_to_vmem [thread:$0]  %s57, 64, %s62, %s59, 256, 96, 1
    %s65 = sadd.s32 %s12, 5
    %s66 = sld [smem:[#allocation4 + %s65]]
    %s67 = smul.addr %s66, 16
    %s68 = scalar_lea.hbm %s1, %s67
    %s69 = scalar_lea.vmem [#allocation5], 5
    %s70 = scalar_lea.sflag [#allocation2], 5
    %s72 = sshll.u32 %s69, 4
    %s73 = int_to_ptr.vmem [resolvable:$true] %s72
    %75 = dma.hbm_to_vmem [thread:$0]  %s68, 64, %s73, %s70, 256, 96, 1
    %s76 = smul.u32 4, 1
    %s77 = smul.u32 %s76, 1
    %s78 = smul.u32 %s77, 1
    %s79 = sshll.u32 %s78, 4
    %80 = dma.done [#allocation2], %s79
    %s81 = sshll.u32 %s78, 4
    %82 = dma.done %s26, %s81
    %s83 = sshll.u32 %s78, 4
    %84 = dma.done %s37, %s83
    %s85 = sshll.u32 %s78, 4
    %86 = dma.done %s48, %s85
    %s87 = sshll.u32 %s78, 4
    %88 = dma.done %s59, %s87
    %s89 = sshll.u32 %s78, 4
    %90 = dma.done %s70, %s89
    // Predicated region
    $region2: #{tpu_custom_call.1} parent=1 // pred_check
      _
    $region3: #{tpu_custom_call.1} parent=1 // pred_check_branch
      %92 = sbr.rel (0) target = $region5
    $region4: #{tpu_custom_call.1} parent=1 // pred_region
      %s94 = ssub.s32 384, 384
      %95 = vsyncadd [#allocation6], %s94
      %s96 = sshll.u32 [#allocation5], 4
      %s97 = int_to_ptr.vmem [resolvable:$true] %s96
      %102 = dma.vmem_to_hbm [thread:$0]  %s97, 384, %s2, [#allocation6], 16, 16, 1
    $region5: #{tpu_custom_call.1} parent=1 // pred_fallthru
      _
    // Predicated region
    $region6: #{tpu_custom_call.1} parent=1 // pred_check
      _
    $region7: #{tpu_custom_call.1} parent=1 // pred_check_branch
      %104 = sbr.rel (0) target = $region9
    $region8: #{tpu_custom_call.1} parent=1 // pred_region
      %105 = dma.done [#allocation6], 384
    $region9: #{tpu_custom_call.1} parent=1 // pred_fallthru
      _
    %106 = vsyncpa [#allocation6], 1
  %107 = vsyncmov [#allocation2]
  %s108 = vpop.sfrf %107
  %p109 = scmp.eq.s32.totalorder %s108, 0
  %p110 = pneg %p109
  %112 = shalt.err (%p110)
  %s113 = scalar_lea.sflag [#allocation2], 1
  %114 = vsyncmov %s113
  %s115 = vpop.sfrf %114
  %p116 = scmp.eq.s32.totalorder %s115, 0
  %p117 = pneg %p116
  %119 = shalt.err (%p117)
  %s120 = scalar_lea.sflag [#allocation2], 2
  %121 = vsyncmov %s120
  %s122 = vpop.sfrf %121
  %p123 = scmp.eq.s32.totalorder %s122, 0
  %p124 = pneg %p123
  %126 = shalt.err (%p124)
  %s127 = scalar_lea.sflag [#allocation2], 3
  %128 = vsyncmov %s127
  %s129 = vpop.sfrf %128
  %p130 = scmp.eq.s32.totalorder %s129, 0
  %p131 = pneg %p130
  %133 = shalt.err (%p131)
  %s134 = scalar_lea.sflag [#allocation2], 4
  %135 = vsyncmov %s134
  %s136 = vpop.sfrf %135
  %p137 = scmp.eq.s32.totalorder %s136, 0
  %p138 = pneg %p137
  %140 = shalt.err (%p138)
  %s141 = scalar_lea.sflag [#allocation2], 5
  %142 = vsyncmov %s141
  %s143 = vpop.sfrf %142
  %p144 = scmp.eq.s32.totalorder %s143, 0
  %p145 = pneg %p144
  %147 = shalt.err (%p145)

</llo_original>
